<compile_context>
chip_gen: v7x
topology: tpu7x:2x2x1
jax: 0.10.0
libtpu: 0.0.40
codegen_flags: <defaults>
</compile_context>

<pallas_src>
import jax
import jax.numpy as jnp
from jax.experimental import pallas as pl
from jax.experimental.pallas import tpu as pltpu


def _ceil_to(v, m):
    return -(-v // m) * m


def _conv_mlp_kernel(x_ref, wconv_ref, bconv_ref, wmlp_ref, bmlp_ref, out_ref):
    # x_ref    : (TM, 3*Cin)   im2col'd input rows for this tile
    # wconv_ref: (3*Cin, Cout) conv taps fused into one contraction
    # bconv_ref: (1, Cout)
    # wmlp_ref : (Cout, Cout)  pre-transposed: y = h @ wmlp + bmlp
    # bmlp_ref : (1, Cout)
    # out_ref  : (TM, Cout)
    h = jnp.dot(x_ref[...], wconv_ref[...], preferred_element_type=jnp.float32)
    h = jnp.maximum(h + bconv_ref[...], 0.0)                       # ReLU after conv
    # TODO(synk): dropout is identity in eval mode; training-mode dropout not implemented.
    h = h.astype(wmlp_ref.dtype)                                   # bf16 path re-narrows, f32 path is a no-op
    y = jnp.dot(h, wmlp_ref[...], preferred_element_type=jnp.float32)
    y = jnp.maximum(y + bmlp_ref[...], 0.0)                        # ReLU after Linear
    out_ref[...] = y.astype(out_ref.dtype)


def conv1d_mlp_embedding(x, conv_w, conv_b, mlp_w, mlp_b, *,
                         tm=512, param_dtype=jnp.float32):
    """x: (B, S, Cin).
    conv_w: (Cout, Cin, 3)  (PyTorch Conv1d weight layout)
    conv_b: (Cout,)
    mlp_w : (Cout, Cout)    (PyTorch Linear weight layout: (out, in))
    mlp_b : (Cout,)
    param_dtype: set to jnp.bfloat16 to halve weight DMA / use bf16 MXU (f32 accum kept).
    returns (B, S, Cout) float32
    """
    B, S, Cin = x.shape
    Cout = conv_w.shape[0]
    K3 = 3 * Cin
    M = B * S

    # --- wrapper-side im2col: conv(k=3, pad=1) -> one GEMM over K=3*Cin -------
    x_pad = jnp.pad(x, ((0, 0), (1, 1), (0, 0)))                      # (B, S+2, Cin)
    x_cat = jnp.concatenate([x_pad[:, k:k + S, :] for k in range(3)],
                            axis=-1)                                  # (B, S, 3*Cin)
    x_cat = x_cat.reshape(M, K3).astype(param_dtype)

    # Repack weights so both stages are plain row-major GEMMs.
    w_conv = jnp.transpose(conv_w, (2, 1, 0)).reshape(K3, Cout).astype(param_dtype)
    b_conv = conv_b.reshape(1, Cout).astype(jnp.float32)
    w_mlp = mlp_w.T.astype(param_dtype)                               # (Cout, Cout)
    b_mlp = mlp_b.reshape(1, Cout).astype(jnp.float32)

    # --- row tiling: large-M tiles, many parallel grid steps ------------------
    tm_eff = min(tm, _ceil_to(M, 8))          # tile rows (multiple of 8)
    m_pad = _ceil_to(M, tm_eff)
    if m_pad != M:
        x_cat = jnp.pad(x_cat, ((0, m_pad - M), (0, 0)))
    grid = (m_pad // tm_eff,)

    out_flat = pl.pallas_call(
        _conv_mlp_kernel,
        out_shape=jax.ShapeDtypeStruct((m_pad, Cout), jnp.float32),
        grid=grid,
        in_specs=[
            pl.BlockSpec((tm_eff, K3), lambda i: (i, 0)),
            pl.BlockSpec((K3, Cout), lambda i: (0, 0)),
            pl.BlockSpec((1, Cout), lambda i: (0, 0)),
            pl.BlockSpec((Cout, Cout), lambda i: (0, 0)),
            pl.BlockSpec((1, Cout), lambda i: (0, 0)),
        ],
        out_specs=pl.BlockSpec((tm_eff, Cout), lambda i: (i, 0)),
        compiler_params=pltpu.CompilerParams(
            dimension_semantics=("parallel",),
            # Modest scoped-VMEM budget: fits the double-buffered row tiles +
            # weights comfortably and stays safe on v7x's 64 MiB physical VMEM.
            vmem_limit_bytes=32 * 1024 * 1024,
        ),
    )(x_cat, w_conv, b_conv, w_mlp, b_mlp)

    return out_flat[:M].reshape(B, S, Cout)


def _reference(x, conv_w, conv_b, mlp_w, mlp_b):
    """Plain-JAX reference mirroring the PyTorch forward (eval mode)."""
    B, S, Cin = x.shape
    Cout = conv_w.shape[0]
    x_pad = jnp.pad(x, ((0, 0), (1, 1), (0, 0)))
    w_taps = jnp.transpose(conv_w, (2, 1, 0))
    acc = jnp.zeros((B, S, Cout), jnp.float32)
    for k in range(3):
        acc = acc + jnp.einsum("bsi,io->bso", x_pad[:, k:k + S, :], w_taps[k])
    h = jnp.maximum(acc + conv_b, 0.0)
    y = jnp.maximum(h @ mlp_w.T + mlp_b, 0.0)
    return y


if __name__ == "__main__":
    key = jax.random.PRNGKey(0)
    B, S, Cin, Cout = 2, 8, 4, 32

    k_x, k_cw, k_cb, k_mw, k_mb = jax.random.split(key, 5)
    x = jax.random.normal(k_x, (B, S, Cin), dtype=jnp.float32)
    # Deterministic parameter init (synthetic, not a checkpoint load).
    conv_w = 0.1 * jax.random.normal(k_cw, (Cout, Cin, 3), dtype=jnp.float32)
    conv_b = 0.1 * jax.random.normal(k_cb, (Cout,), dtype=jnp.float32)
    mlp_w = 0.1 * jax.random.normal(k_mw, (Cout, Cout), dtype=jnp.float32)
    mlp_b = 0.1 * jax.random.normal(k_mb, (Cout,), dtype=jnp.float32)

    out = conv1d_mlp_embedding(x, conv_w, conv_b, mlp_w, mlp_b)
    out = jax.block_until_ready(out)

    ref = _reference(x, conv_w, conv_b, mlp_w, mlp_b)
    assert out.shape == (B, S, Cout)
    assert jnp.allclose(out, ref, atol=1e-5, rtol=1e-5)

    print("KERNEL_OK")
</pallas_src>

<mosaic_0001>
module attributes {stable_mosaic.version = 11 : i64} {
  func.func @_conv_mlp_kernel(%arg0: i32, %arg1: memref<16x12xf32, #tpu.memory_space<vmem>>, %arg2: memref<12x32xf32, #tpu.memory_space<vmem>>, %arg3: memref<1x32xf32, #tpu.memory_space<vmem>>, %arg4: memref<32x32xf32, #tpu.memory_space<vmem>>, %arg5: memref<1x32xf32, #tpu.memory_space<vmem>>, %arg6: memref<16x32xf32, #tpu.memory_space<vmem>>) attributes {dimension_semantics = [#tpu.dimension_semantics<parallel>], iteration_bounds = array<i64: 1>, scalar_prefetch = 0 : i64, scratch_operands = 0 : i64, tpu.core_type = #tpu.core_type<tc>, window_params = [{transform_indices = @transform_0, window_bounds = array<i64: 16, 12>}, {pipeline_mode = #tpu.pipeline_mode<synchronous>, transform_indices = @transform_1, window_bounds = array<i64: 12, 32>}, {pipeline_mode = #tpu.pipeline_mode<synchronous>, transform_indices = @transform_2, window_bounds = array<i64: 1, 32>}, {pipeline_mode = #tpu.pipeline_mode<synchronous>, transform_indices = @transform_3, window_bounds = array<i64: 32, 32>}, {pipeline_mode = #tpu.pipeline_mode<synchronous>, transform_indices = @transform_4, window_bounds = array<i64: 1, 32>}, {transform_indices = @transform_5, window_bounds = array<i64: 16, 32>}]} {
    %c0 = arith.constant 0 : index
    %c0_0 = arith.constant 0 : index
    %0 = vector.load %arg1[%c0, %c0_0] : memref<16x12xf32, #tpu.memory_space<vmem>>, vector<16x12xf32>
    %c0_1 = arith.constant 0 : index
    %c0_2 = arith.constant 0 : index
    %1 = vector.load %arg2[%c0_1, %c0_2] : memref<12x32xf32, #tpu.memory_space<vmem>>, vector<12x32xf32>
    %cst = arith.constant dense<0.000000e+00> : vector<16x32xf32>
    %2 = tpu.matmul %0, %1, %cst {dimension_numbers = #tpu.dot_dimension_numbers<[1], [0], [0], [1], [0, 0, 1, 1], [], []>} : vector<16x12xf32>, vector<12x32xf32>, vector<16x32xf32> -> vector<16x32xf32>
    %c0_3 = arith.constant 0 : index
    %c0_4 = arith.constant 0 : index
    %3 = vector.load %arg3[%c0_3, %c0_4] : memref<1x32xf32, #tpu.memory_space<vmem>>, vector<1x32xf32>
    %4 = vector.broadcast %3 : vector<1x32xf32> to vector<16x32xf32>
    %5 = arith.addf %2, %4 : vector<16x32xf32>
    %cst_5 = arith.constant 0.000000e+00 : f32
    %6 = vector.broadcast %cst_5 : f32 to vector<16x32xf32>
    %7 = arith.maximumf %5, %6 : vector<16x32xf32>
    %c0_6 = arith.constant 0 : index
    %c0_7 = arith.constant 0 : index
    %8 = vector.load %arg4[%c0_6, %c0_7] : memref<32x32xf32, #tpu.memory_space<vmem>>, vector<32x32xf32>
    %cst_8 = arith.constant dense<0.000000e+00> : vector<16x32xf32>
    %9 = tpu.matmul %7, %8, %cst_8 {dimension_numbers = #tpu.dot_dimension_numbers<[1], [0], [0], [1], [0, 0, 1, 1], [], []>} : vector<16x32xf32>, vector<32x32xf32>, vector<16x32xf32> -> vector<16x32xf32>
    %c0_9 = arith.constant 0 : index
    %c0_10 = arith.constant 0 : index
    %10 = vector.load %arg5[%c0_9, %c0_10] : memref<1x32xf32, #tpu.memory_space<vmem>>, vector<1x32xf32>
    %11 = vector.broadcast %10 : vector<1x32xf32> to vector<16x32xf32>
    %12 = arith.addf %9, %11 : vector<16x32xf32>
    %cst_11 = arith.constant 0.000000e+00 : f32
    %13 = vector.broadcast %cst_11 : f32 to vector<16x32xf32>
    %14 = arith.maximumf %12, %13 : vector<16x32xf32>
    %c0_12 = arith.constant 0 : index
    %c0_13 = arith.constant 0 : index
    %15 = vector.load %arg6[%c0_12, %c0_13] : memref<16x32xf32, #tpu.memory_space<vmem>>, vector<16x32xf32>
    tpu.vector_store %arg6[%c0_12, %c0_13], %14 {strides = array<i32>} : memref<16x32xf32, #tpu.memory_space<vmem>>, vector<16x32xf32>,
    return
  }
  func.func @transform_0(%arg0: i32) -> (i32, i32) {
    %c0_i32 = arith.constant 0 : i32
    %c0_i32_0 = arith.constant 0 : i32
    return %arg0, %c0_i32 : i32, i32
  }
  func.func @transform_1(%arg0: i32) -> (i32, i32) {
    %c0_i32 = arith.constant 0 : i32
    %c0_i32_0 = arith.constant 0 : i32
    %c0_i32_1 = arith.constant 0 : i32
    return %c0_i32, %c0_i32_0 : i32, i32
  }
  func.func @transform_2(%arg0: i32) -> (i32, i32) {
    %c0_i32 = arith.constant 0 : i32
    %c0_i32_0 = arith.constant 0 : i32
    %c0_i32_1 = arith.constant 0 : i32
    return %c0_i32, %c0_i32_0 : i32, i32
  }
  func.func @transform_3(%arg0: i32) -> (i32, i32) {
    %c0_i32 = arith.constant 0 : i32
    %c0_i32_0 = arith.constant 0 : i32
    %c0_i32_1 = arith.constant 0 : i32
    return %c0_i32, %c0_i32_0 : i32, i32
  }
  func.func @transform_4(%arg0: i32) -> (i32, i32) {
    %c0_i32 = arith.constant 0 : i32
    %c0_i32_0 = arith.constant 0 : i32
    %c0_i32_1 = arith.constant 0 : i32
    return %c0_i32, %c0_i32_0 : i32, i32
  }
  func.func @transform_5(%arg0: i32) -> (i32, i32) {
    %c0_i32 = arith.constant 0 : i32
    %c0_i32_0 = arith.constant 0 : i32
    return %arg0, %c0_i32 : i32, i32
  }
}

</mosaic_0001>

<llo_original>
// kernel: tpu_custom_call.1
$region0: #{tpu_custom_call.1}
  #allocation0 [shape = 'u32[]', space=smem, size = 0x4, offset = 0x4, fixed_abs, tag = 'smem constant byte address 0x4 - core index']
  #allocation1 [shape = 'u32[144,128]{1,0:T(1,128)}', space=vmem, size = 0x12000, scoped, tag = 'internal scratch']
  %s0 = inlined_call_operand.hbm [shape: f32[16,12], index: 0, kind: input, shape index: {}]
  %s1 = inlined_call_operand.hbm [shape: f32[12,32], index: 1, kind: input, shape index: {}]
  %s2 = inlined_call_operand.vmem [shape: f32[1,32], index: 2, kind: input, shape index: {}]
  %s3 = inlined_call_operand.hbm [shape: f32[32,32], index: 3, kind: input, shape index: {}]
  %s4 = inlined_call_operand.vmem [shape: f32[1,32], index: 4, kind: input, shape index: {}]
  %s5 = inlined_call_operand.hbm [shape: f32[16,32], index: 5, kind: output, shape index: {}]
  %s6 = sld [smem:[#allocation0]]
  $region42: #{tpu_custom_call.1} parent=0
    _
  %s8 = ssub.s32 1, %s6
  %s9 = scalar_select 0, %s8, %s6
  $region1: #{tpu_custom_call.1} parent=0
    #allocation2 [shape = 'u8[8192]{0}', space=vmem, size = 0x2000, scoped, tag = 'input window, operand 0, single buffered']
    #allocation3 [shape = 's32[1]{0}', space=sflag, size = 0x4, scoped, tag = 'scoped memory for tpu_custom_call.1']
    #allocation4 [shape = 's32[1]{0}', space=sflag, size = 0x4, scoped, tag = 'scoped memory for tpu_custom_call.1']
    #allocation5 [shape = 'u8[8192]{0}', space=vmem, size = 0x2000, scoped, tag = 'input window, operand 1, single buffered']
    #allocation6 [shape = 's32[1]{0}', space=sflag, size = 0x4, scoped, tag = 'scoped memory for tpu_custom_call.1']
    #allocation7 [shape = 'u8[16384]{0}', space=vmem, size = 0x4000, scoped, tag = 'input window, operand 3, single buffered']
    #allocation8 [shape = 'u8[8192]{0}', space=vmem, size = 0x2000, scoped, tag = 'output window, operand 0, single buffered']
    %10 = vsyncpa [#allocation3], 0
    %11 = vsyncpa [#allocation6], 0
    %12 = vsyncpa [#allocation4], 0
    // Predicated region
    $region2: #{tpu_custom_call.1} parent=1 // pred_check
      _
    $region3: #{tpu_custom_call.1} parent=1 // pred_check_branch
      %14 = sbr.rel (0) target = $region5
    $region4: #{tpu_custom_call.1} parent=1 // pred_region
      %s16 = ssub.s32 256, 256
      %17 = vsyncadd [#allocation3], %s16
      %s18 = sshll.u32 [#allocation2], 4
      %s19 = int_to_ptr.vmem [resolvable:$true] %s18
      %24 = dma.hbm_to_vmem [thread:$0]  %s0, 256, %s19, [#allocation3], 128, 128, 8
    $region5: #{tpu_custom_call.1} parent=1 // pred_fallthru
      _
    // Predicated region
    $region6: #{tpu_custom_call.1} parent=1 // pred_check
      _
    $region7: #{tpu_custom_call.1} parent=1 // pred_check_branch
      %26 = sbr.rel (0) target = $region9
    $region8: #{tpu_custom_call.1} parent=1 // pred_region
      %s28 = ssub.s32 256, 256
      %29 = vsyncadd [#allocation6], %s28
      %s30 = sshll.u32 [#allocation5], 4
      %s31 = int_to_ptr.vmem [resolvable:$true] %s30
      %36 = dma.hbm_to_vmem [thread:$0]  %s1, 256, %s31, [#allocation6], 128, 128, 8
    $region9: #{tpu_custom_call.1} parent=1 // pred_fallthru
      _
    // Predicated region
    $region10: #{tpu_custom_call.1} parent=1 // pred_check
      _
    $region11: #{tpu_custom_call.1} parent=1 // pred_check_branch
      %38 = sbr.rel (0) target = $region13
    $region12: #{tpu_custom_call.1} parent=1 // pred_region
      _
    $region13: #{tpu_custom_call.1} parent=1 // pred_fallthru
      _
    // Predicated region
    $region14: #{tpu_custom_call.1} parent=1 // pred_check
      _
    $region15: #{tpu_custom_call.1} parent=1 // pred_check_branch
      %40 = sbr.rel (0) target = $region17
    $region16: #{tpu_custom_call.1} parent=1 // pred_region
      %s42 = ssub.s32 512, 512
      %43 = vsyncadd [#allocation6], %s42
      %s44 = sshll.u32 [#allocation7], 4
      %s45 = int_to_ptr.vmem [resolvable:$true] %s44
      %50 = dma.hbm_to_vmem [thread:$0]  %s3, 512, %s45, [#allocation6], 128, 128, 8
    $region17: #{tpu_custom_call.1} parent=1 // pred_fallthru
      _
    // Predicated region
    $region18: #{tpu_custom_call.1} parent=1 // pred_check
      _
    $region19: #{tpu_custom_call.1} parent=1 // pred_check_branch
      %52 = sbr.rel (0) target = $region21
    $region20: #{tpu_custom_call.1} parent=1 // pred_region
      _
    $region21: #{tpu_custom_call.1} parent=1 // pred_fallthru
      _
    // Predicated region
    $region22: #{tpu_custom_call.1} parent=1 // pred_check
      _
    $region23: #{tpu_custom_call.1} parent=1 // pred_check_branch
      %54 = sbr.rel (0) target = $region25
    $region24: #{tpu_custom_call.1} parent=1 // pred_region
      %55 = dma.done [#allocation3], 256
    $region25: #{tpu_custom_call.1} parent=1 // pred_fallthru
      _
    // Predicated region
    $region26: #{tpu_custom_call.1} parent=1 // pred_check
      _
    $region27: #{tpu_custom_call.1} parent=1 // pred_check_branch
      %57 = sbr.rel (0) target = $region29
    $region28: #{tpu_custom_call.1} parent=1 // pred_region
      %58 = dma.done [#allocation6], 256
    $region29: #{tpu_custom_call.1} parent=1 // pred_fallthru
      _
    // Predicated region
    $region30: #{tpu_custom_call.1} parent=1 // pred_check
      _
    $region31: #{tpu_custom_call.1} parent=1 // pred_check_branch
      %60 = sbr.rel (0) target = $region33
    $region32: #{tpu_custom_call.1} parent=1 // pred_region
      %61 = dma.done [#allocation6], 512
    $region33: #{tpu_custom_call.1} parent=1 // pred_fallthru
      _
    %v62 = vld [vmem:[#allocation2] sm:$0xff]
    %v63 = vld [vmem:[#allocation2 + $0x8] sm:$0xff]
    %v64 = vld [vmem:[#allocation5] sm:$0xff]
    %v65 = vld [vmem:[#allocation5 + $0x8] sm:$0xf]
    %v66 = vld [vmem:[%s2] sm:$0x1]
    %v68 = vlaneseq
    %v69 = vshrl.u32 %v68, 7
    %v70 = vsub.s32 0, %v69
    %v71 = vrot.slane %v66, %v70
    %vm73 = vcmask 97280
    %v75 = vsel %vm73, %v62, 0
    %v78 = vsel %vm73, %v63, 0
    %vm80 = vcmask 1043456
    %v82 = vsel %vm80, %v65, 0
    %84 = vmatprep.subr.mxu0 0.0
    %85 = vmatpush1.msra.mxu0 %v64
    %86 = vmatprep.subr.mxu0 0.0
    %87 = vmatpush1.msra.mxu0 %v82
    %88 = vmatprep.subr.mxu0 0.0
    %89 = vmatpush1.msra.mxu0 0.0
    %90 = vmatprep.subr.mxu0 0.0
    %91 = vmatpush1.msra.mxu0 0.0
    %92 = vmatprep.subr.mxu0 0.0
    %93 = vmatpush1.msra.mxu0 0.0
    %94 = vmatprep.subr.mxu0 0.0
    %95 = vmatpush1.msra.mxu0 0.0
    %96 = vmatprep.subr.mxu0 0.0
    %97 = vmatpush1.msra.mxu0 0.0
    %98 = vmatprep.subr.mxu0 0.0
    %99 = vmatpush1.msra.mxu0 0.0
    %100 = vmatprep.subr.mxu0 0.0
    %101 = vmatpush1.msra.mxu0 0.0
    %102 = vmatprep.subr.mxu0 0.0
    %103 = vmatpush1.msra.mxu0 0.0
    %104 = vmatprep.subr.mxu0 0.0
    %105 = vmatpush1.msra.mxu0 0.0
    %106 = vmatprep.subr.mxu0 0.0
    %107 = vmatpush1.msra.mxu0 0.0
    %108 = vmatprep.subr.mxu0 0.0
    %109 = vmatpush1.msra.mxu0 0.0
    %110 = vmatprep.subr.mxu0 0.0
    %111 = vmatpush1.msra.mxu0 0.0
    %112 = vmatprep.subr.mxu0 0.0
    %113 = vmatpush1.msra.mxu0 0.0
    %114 = vmatprep.subr.mxu0 0.0
    %115 = vmatpush1.msra.mxu0 0.0
    %116 = vmatprep.subr.mxu0 0.0
    %117 = vmatpush1.msra.mxu0 0.0
    %118 = vmatprep.subr.mxu0 0.0
    %119 = vmatpush1.msra.mxu0 0.0
    %120 = vmatprep.subr.mxu0 0.0
    %121 = vmatpush1.msra.mxu0 0.0
    %122 = vmatprep.subr.mxu0 0.0
    %123 = vmatpush1.msra.mxu0 0.0
    %124 = vmatprep.subr.mxu0 0.0
    %125 = vmatpush1.msra.mxu0 0.0
    %126 = vmatprep.subr.mxu0 0.0
    %127 = vmatpush1.msra.mxu0 0.0
    %128 = vmatprep.subr.mxu0 0.0
    %129 = vmatpush1.msra.mxu0 0.0
    %130 = vmatprep.subr.mxu0 0.0
    %131 = vmatpush1.msra.mxu0 0.0
    %132 = vmatprep.subr.mxu0 0.0
    %133 = vmatpush1.msra.mxu0 0.0
    %134 = vmatprep.subr.mxu0 0.0
    %135 = vmatpush1.msra.mxu0 0.0
    %136 = vmatprep.subr.mxu0 0.0
    %137 = vmatpush1.msra.mxu0 0.0
    %138 = vmatprep.subr.mxu0 0.0
    %139 = vmatpush1.msra.mxu0 0.0
    %140 = vmatprep.subr.mxu0 0.0
    %141 = vmatpush1.msra.mxu0 0.0
    %142 = vmatprep.subr.mxu0 0.0
    %143 = vmatpush1.msra.mxu0 0.0
    %144 = vmatprep.subr.mxu0 0.0
    %145 = vmatpush1.msra.mxu0 0.0
    %146 = vmatprep.subr.mxu0 0.0
    %147 = vmatpush1.msra.mxu0 0.0
    %148 = vmatprep.mubr.f32.mxu0 0.0
    %149 = vmatmul.mubr.f32.gmra.mrb[0].mxu0 %v75
    %v150 = vpop.f32.mrb[0].mxu0
    %v151 = vadd.f32 %v71, %v150
    %v152 = vpop.f32.mrb[0].mxu0
    %153 = vmatprep.mubr.f32.mxu0 0.0
    %154 = vmatmul.mubr.f32.gmra.mrb[0].mxu0 %v78
    %v155 = vpop.f32.mrb[0].mxu0
    %v156 = vadd.f32 %v71, %v155
    %v157 = vpop.f32.mrb[0].mxu0
    %158 = vdwg.mxu0
    %v159 = vmax.f32 %v151, 0.0
    %v160 = vmax.f32 %v156, 0.0
    %v161 = vld [vmem:[#allocation7] sm:$0xff]
    %v162 = vld [vmem:[#allocation7 + $0x8] sm:$0xff]
    %v163 = vld [vmem:[#allocation7 + $0x10] sm:$0xff]
    %v164 = vld [vmem:[#allocation7 + $0x18] sm:$0xff]
    %v165 = vld [vmem:[%s4] sm:$0x1]
    %v167 = vlaneseq
    %v168 = vshrl.u32 %v167, 7
    %v169 = vsub.s32 0, %v168
    %v170 = vrot.slane %v165, %v169
    %vm172 = vcmask 261120
    %v174 = vsel %vm172, %v159, 0
    %v177 = vsel %vm172, %v160, 0
    %179 = vmatprep.subr.mxu0 0.0
    %180 = vmatpush1.msra.mxu0 %v161
    %181 = vmatprep.subr.mxu0 0.0
    %182 = vmatpush1.msra.mxu0 %v162
    %183 = vmatprep.subr.mxu0 0.0
    %184 = vmatpush1.msra.mxu0 %v163
    %185 = vmatprep.subr.mxu0 0.0
    %186 = vmatpush1.msra.mxu0 %v164
    %187 = vmatprep.subr.mxu0 0.0
    %188 = vmatpush1.msra.mxu0 0.0
    %189 = vmatprep.subr.mxu0 0.0
    %190 = vmatpush1.msra.mxu0 0.0
    %191 = vmatprep.subr.mxu0 0.0
    %192 = vmatpush1.msra.mxu0 0.0
    %193 = vmatprep.subr.mxu0 0.0
    %194 = vmatpush1.msra.mxu0 0.0
    %195 = vmatprep.subr.mxu0 0.0
    %196 = vmatpush1.msra.mxu0 0.0
    %197 = vmatprep.subr.mxu0 0.0
    %198 = vmatpush1.msra.mxu0 0.0
    %199 = vmatprep.subr.mxu0 0.0
    %200 = vmatpush1.msra.mxu0 0.0
    %201 = vmatprep.subr.mxu0 0.0
    %202 = vmatpush1.msra.mxu0 0.0
    %203 = vmatprep.subr.mxu0 0.0
    %204 = vmatpush1.msra.mxu0 0.0
    %205 = vmatprep.subr.mxu0 0.0
    %206 = vmatpush1.msra.mxu0 0.0
    %207 = vmatprep.subr.mxu0 0.0
    %208 = vmatpush1.msra.mxu0 0.0
    %209 = vmatprep.subr.mxu0 0.0
    %210 = vmatpush1.msra.mxu0 0.0
    %211 = vmatprep.subr.mxu0 0.0
    %212 = vmatpush1.msra.mxu0 0.0
    %213 = vmatprep.subr.mxu0 0.0
    %214 = vmatpush1.msra.mxu0 0.0
    %215 = vmatprep.subr.mxu0 0.0
    %216 = vmatpush1.msra.mxu0 0.0
    %217 = vmatprep.subr.mxu0 0.0
    %218 = vmatpush1.msra.mxu0 0.0
    %219 = vmatprep.subr.mxu0 0.0
    %220 = vmatpush1.msra.mxu0 0.0
    %221 = vmatprep.subr.mxu0 0.0
    %222 = vmatpush1.msra.mxu0 0.0
    %223 = vmatprep.subr.mxu0 0.0
    %224 = vmatpush1.msra.mxu0 0.0
    %225 = vmatprep.subr.mxu0 0.0
    %226 = vmatpush1.msra.mxu0 0.0
    %227 = vmatprep.subr.mxu0 0.0
    %228 = vmatpush1.msra.mxu0 0.0
    %229 = vmatprep.subr.mxu0 0.0
    %230 = vmatpush1.msra.mxu0 0.0
    %231 = vmatprep.subr.mxu0 0.0
    %232 = vmatpush1.msra.mxu0 0.0
    %233 = vmatprep.subr.mxu0 0.0
    %234 = vmatpush1.msra.mxu0 0.0
    %235 = vmatprep.subr.mxu0 0.0
    %236 = vmatpush1.msra.mxu0 0.0
    %237 = vmatprep.subr.mxu0 0.0
    %238 = vmatpush1.msra.mxu0 0.0
    %239 = vmatprep.subr.mxu0 0.0
    %240 = vmatpush1.msra.mxu0 0.0
    %241 = vmatprep.subr.mxu0 0.0
    %242 = vmatpush1.msra.mxu0 0.0
    %243 = vmatprep.mubr.f32.mxu0 0.0
    %244 = vmatmul.mubr.f32.gmra.mrb[0].mxu0 %v174
    %v245 = vpop.f32.mrb[0].mxu0
    %v246 = vadd.f32 %v170, %v245
    %v247 = vpop.f32.mrb[0].mxu0
    %248 = vmatprep.mubr.f32.mxu0 0.0
    %249 = vmatmul.mubr.f32.gmra.mrb[0].mxu0 %v177
    %v250 = vpop.f32.mrb[0].mxu0
    %v251 = vadd.f32 %v170, %v250
    %v252 = vpop.f32.mrb[0].mxu0
    %253 = vdwg.mxu0
    %v254 = vmax.f32 %v246, 0.0
    %v255 = vmax.f32 %v251, 0.0
    %256 = vst.msk [vmem:[#allocation8] sm:$0xff] %vm172, %v254
    %257 = vst.msk [vmem:[#allocation8 + $0x8] sm:$0xff] %vm172, %v255
    // Predicated region
    $region34: #{tpu_custom_call.1} parent=1 // pred_check
      _
    $region35: #{tpu_custom_call.1} parent=1 // pred_check_branch
      %259 = sbr.rel (0) target = $region37
    $region36: #{tpu_custom_call.1} parent=1 // pred_region
      %s261 = ssub.s32 256, 256
      %262 = vsyncadd [#allocation4], %s261
      %s263 = sshll.u32 [#allocation8], 4
      %s264 = int_to_ptr.vmem [resolvable:$true] %s263
      %269 = dma.vmem_to_hbm [thread:$0]  %s264, 256, %s5, [#allocation4], 128, 128, 8
    $region37: #{tpu_custom_call.1} parent=1 // pred_fallthru
      _
    // Predicated region
    $region38: #{tpu_custom_call.1} parent=1 // pred_check
      _
    $region39: #{tpu_custom_call.1} parent=1 // pred_check_branch
      %271 = sbr.rel (0) target = $region41
    $region40: #{tpu_custom_call.1} parent=1 // pred_region
      %272 = dma.done [#allocation4], 256
    $region41: #{tpu_custom_call.1} parent=1 // pred_fallthru
      _
    %273 = vsyncpa [#allocation3], 1
    %274 = vsyncpa [#allocation6], 1
    %275 = vsyncpa [#allocation4], 1

</llo_original>
